<compile_context>
chip_gen: v7x
topology: tpu7x:2x2x1
jax: 0.10.0
libtpu: 0.0.40
codegen_flags: <defaults>
</compile_context>

<pallas_src>
import math

import numpy as np
import jax
import jax.numpy as jnp
from jax.experimental import pallas as pl
from jax.experimental.pallas import tpu as pltpu


def _round_up(x, m):
    return ((x + m - 1) // m) * m


def _make_cost_kernel(w_class, w_giou):
    def kernel(logits_ref, pred_ref, tgt_ref, onehot_ref, cost_ref):
        # ---- class cost: softmax + one-hot gather as an MXU matmul ----------
        logits = logits_ref[...]                               # (Tn, Cp) f32
        mx = jnp.max(logits, axis=-1, keepdims=True)
        ex = jnp.exp(logits - mx)
        denom = jnp.sum(ex, axis=-1, keepdims=True)
        probs = ex * pl.reciprocal(denom, approx=True)         # (Tn, Cp)
        probs_bf = (probs * w_class).astype(jnp.bfloat16)
        onehot_bf = onehot_ref[...].astype(jnp.bfloat16)       # (Cp, Mp), {0, -1}
        # acc = -w_class * prob[n, tgt_id[m]]  (accumulated in f32 on the MXU)
        acc = jnp.dot(probs_bf, onehot_bf,
                      preferred_element_type=jnp.float32)      # (Tn, Mp)

        p = pred_ref[...]                                      # (Tn, 16) f32
        t = tgt_ref[...]                                       # (16, Mp) f32

        # ---- L1 box + rotation cost (weights pre-folded in the wrapper) -----
        for k in range(8):                                     # 3 ctr + 3 dim + 2 rot
            acc = acc + jnp.abs(p[:, k:k + 1] - t[k:k + 1, :])

        # ---- nearest-BEV IoU from precomputed corners / areas ---------------
        ax1 = p[:, 8:9]
        ay1 = p[:, 9:10]
        ax2 = p[:, 10:11]
        ay2 = p[:, 11:12]
        area_a = p[:, 12:13]
        bx1 = t[8:9, :]
        by1 = t[9:10, :]
        bx2 = t[10:11, :]
        by2 = t[11:12, :]
        area_b = t[12:13, :]

        x_ov = jnp.maximum(jnp.minimum(ax2, bx2) - jnp.maximum(ax1, bx1), 0.0)
        y_ov = jnp.maximum(jnp.minimum(ay2, by2) - jnp.maximum(ay1, by1), 0.0)
        inter = x_ov * y_ov
        inv = pl.reciprocal(jnp.maximum(area_a + area_b - inter, 1e-6),
                            approx=True)

        cost_ref[...] = acc - (w_giou * inter) * inv

    return kernel


def hungarian_matcher_cost(pred_logits, pred_boxes_match, pred_rot,
                           gt_boxes, tgt_ids, image_size_tgt, offset,
                           grid_size_tgt, grid_size_out_per_batch,
                           cost_class=1.0, cost_bbox=1.0, cost_giou=1.0,
                           tile_n=256):
    """Computes C.view(bs, num_queries, total_targets) of the matcher."""
    bs, nq, C = pred_logits.shape
    N = bs * nq
    M = gt_boxes.shape[0]
    PI = math.pi
    f32 = jnp.float32

    w_c = float(cost_class)
    w_b = float(cost_bbox)
    w_g = float(cost_giou)
    # w_bbox is folded into the L1 operands (|w*a - w*b| == w*|a-b| needs w >= 0).
    assert w_b >= 0.0, "cost_bbox must be non-negative (standard for matching costs)"

    # ---------------- prediction-side per-row preprocessing ------------------
    logits = pred_logits.reshape(N, C).astype(f32)
    ob = pred_boxes_match.reshape(N, 7).astype(f32)
    rot = pred_rot.reshape(N, 2).astype(f32)
    go = jnp.repeat(grid_size_out_per_batch.astype(f32)[:, None, :], nq,
                    axis=1).reshape(N, 3)

    ctr_s = (w_b * ob[:, 0:3]) / go
    dim_s = (w_b * ob[:, 3:6]) / go
    rot_s = (0.5 * w_b) * rot

    ang_a = ob[:, 6]
    rot_abs_a = jnp.abs(ang_a - jnp.floor(ang_a / PI + 0.5) * PI)
    cond_a = rot_abs_a < (PI / 4.0)
    adx = jnp.where(cond_a, ob[:, 3], ob[:, 4])
    ady = jnp.where(cond_a, ob[:, 4], ob[:, 3])
    ax1 = ob[:, 0] - 0.5 * adx
    ax2 = ob[:, 0] + 0.5 * adx
    ay1 = ob[:, 1] - 0.5 * ady
    ay2 = ob[:, 1] + 0.5 * ady
    area_a = (ax2 - ax1) * (ay2 - ay1)

    pred_pack = jnp.concatenate(
        [ctr_s, dim_s, rot_s,
         ax1[:, None], ay1[:, None], ax2[:, None], ay2[:, None], area_a[:, None],
         jnp.zeros((N, 3), f32)], axis=1)                     # (N, 16)

    # ---------------- target-side preprocessing (done once, not per tile) ----
    tb = gt_boxes.astype(f32)
    offs = offset.astype(f32)
    img = image_size_tgt.astype(f32)
    gts = grid_size_tgt.astype(f32)
    ids = tgt_ids.reshape(M).astype(jnp.int32)

    tgt_ctr_n = (tb[:, 0:3] - offs) / img
    tgt_dim_n = tb[:, 3:6] / img
    ang_t = tb[:, 6]

    bev_ctr = tgt_ctr_n * gts
    bev_dim = tgt_dim_n * gts
    rot_abs_b = jnp.abs(ang_t - jnp.floor(ang_t / PI + 0.5) * PI)
    cond_b = rot_abs_b < (PI / 4.0)
    bdx = jnp.where(cond_b, bev_dim[:, 0], bev_dim[:, 1])
    bdy = jnp.where(cond_b, bev_dim[:, 1], bev_dim[:, 0])
    bx1 = bev_ctr[:, 0] - 0.5 * bdx
    bx2 = bev_ctr[:, 0] + 0.5 * bdx
    by1 = bev_ctr[:, 1] - 0.5 * bdy
    by2 = bev_ctr[:, 1] + 0.5 * bdy
    area_b = (bx2 - bx1) * (by2 - by1)

    tgt_pack = jnp.concatenate(
        [(w_b * tgt_ctr_n).T, (w_b * tgt_dim_n).T,
         (0.5 * w_b) * jnp.stack([jnp.sin(ang_t), jnp.cos(ang_t)], axis=0),
         bx1[None, :], by1[None, :], bx2[None, :], by2[None, :], area_b[None, :],
         jnp.zeros((3, M), f32)], axis=0)                     # (16, M)

    # -one-hot of the target classes (rows = classes, padded to 128 for the MXU)
    C_pad = _round_up(max(C, 1), 128)
    onehot_neg = -(jnp.arange(C_pad, dtype=jnp.int32)[:, None]
                   == ids[None, :]).astype(f32)               # (C_pad, M), {0,-1}

    # ---------------- padding to TPU-friendly shapes --------------------------
    tile_n = min(int(tile_n), _round_up(N, 8))
    N_pad = _round_up(N, tile_n)
    M_pad = _round_up(M, 128)                                 # lane-dense output stores

    logits_p = jnp.full((N_pad, C_pad), -1e9, f32).at[:N, :C].set(logits)
    pred_p = jnp.zeros((N_pad, 16), f32).at[:N, :].set(pred_pack)
    tgt_p = jnp.zeros((16, M_pad), f32).at[:, :M].set(tgt_pack)
    onehot_p = jnp.zeros((C_pad, M_pad), f32).at[:, :M].set(onehot_neg)

    # ---------------- pallas call ---------------------------------------------
    grid = (N_pad // tile_n,)
    est_bytes = 4 * (2 * tile_n * M_pad              # double-buffered output tile
                     + 2 * tile_n * (C_pad + 16)     # double-buffered prediction tiles
                     + 2 * (16 + C_pad) * M_pad      # target blocks
                     + 10 * tile_n * M_pad)          # in-flight (tile_n, M_pad) temps
    vmem_limit = int(min(max(2 * est_bytes, 8 * 1024 * 1024), 48 * 1024 * 1024))

    cost = pl.pallas_call(
        _make_cost_kernel(w_c, w_g),
        out_shape=jax.ShapeDtypeStruct((N_pad, M_pad), f32),
        grid=grid,
        in_specs=[
            pl.BlockSpec((tile_n, C_pad), lambda i: (i, 0)),
            pl.BlockSpec((tile_n, 16), lambda i: (i, 0)),
            pl.BlockSpec((16, M_pad), lambda i: (0, 0)),
            pl.BlockSpec((C_pad, M_pad), lambda i: (0, 0)),
        ],
        out_specs=pl.BlockSpec((tile_n, M_pad), lambda i: (i, 0)),
        compiler_params=pltpu.CompilerParams(
            dimension_semantics=("parallel",),
            vmem_limit_bytes=vmem_limit,
        ),
    )(logits_p, pred_p, tgt_p, onehot_p)

    return cost[:N, :M].reshape(bs, nq, M)


# ---------------------------- pure-JAX reference ------------------------------
def _bev_iou_ref(boxes_a, boxes_b):
    def to_bev(b):
        rot = jnp.abs(b[:, 6] - jnp.floor(b[:, 6] / np.pi + 0.5) * np.pi)
        cond = rot < np.pi / 4
        dx = jnp.where(cond, b[:, 3], b[:, 4])
        dy = jnp.where(cond, b[:, 4], b[:, 3])
        return jnp.stack([b[:, 0] - dx / 2, b[:, 1] - dy / 2,
                          b[:, 0] + dx / 2, b[:, 1] + dy / 2], axis=1)
    a = to_bev(boxes_a)
    b = to_bev(boxes_b)
    x_min = jnp.maximum(a[:, 0, None], b[None, :, 0])
    x_max = jnp.minimum(a[:, 2, None], b[None, :, 2])
    y_min = jnp.maximum(a[:, 1, None], b[None, :, 1])
    y_max = jnp.minimum(a[:, 3, None], b[None, :, 3])
    inter = jnp.clip(x_max - x_min, 0) * jnp.clip(y_max - y_min, 0)
    area_a = (a[:, 2] - a[:, 0]) * (a[:, 3] - a[:, 1])
    area_b = (b[:, 2] - b[:, 0]) * (b[:, 3] - b[:, 1])
    return inter / jnp.maximum(area_a[:, None] + area_b[None, :] - inter, 1e-6)


def reference_cost(pred_logits, pred_boxes_match, pred_rot, gt_boxes, tgt_ids,
                   image_size_tgt, offset, grid_size_tgt, grid_size_out_pb,
                   w_class=1.0, w_bbox=1.0, w_giou=1.0):
    bs, nq, nc = pred_logits.shape
    out_prob = jax.nn.softmax(pred_logits.reshape(bs * nq, nc), axis=-1)
    out_bbox = pred_boxes_match.reshape(bs * nq, 7)
    grid_out = jnp.repeat(grid_size_out_pb[:, None, :], nq, axis=1).reshape(bs * nq, 3)
    out_bbox_ = out_bbox.at[:, :3].set(out_bbox[:, :3] / grid_out)
    out_bbox_ = out_bbox_.at[:, 3:6].set(out_bbox[:, 3:6] / grid_out)
    tgt_bbox_ = gt_boxes.at[:, :3].set((gt_boxes[:, :3] - offset) / image_size_tgt)
    tgt_bbox_ = tgt_bbox_.at[:, 3:6].set(gt_boxes[:, 3:6] / image_size_tgt)
    tgt_angle = jnp.stack([jnp.sin(tgt_bbox_[:, -1]), jnp.cos(tgt_bbox_[:, -1])], axis=-1)
    cost_bbox = jnp.sum(jnp.abs(out_bbox_[:, None, :6] - tgt_bbox_[None, :, :6]), axis=-1)
    rot = pred_rot.reshape(bs * nq, 2)
    cw = jnp.array([0.5, 0.5], jnp.float32)
    cost_r = jnp.sum(jnp.abs((rot * cw)[:, None, :] - (tgt_angle * cw)[None, :, :]), axis=-1)
    cost_bbox = cost_bbox + cost_r
    bev_tgt = gt_boxes.at[:, :3].set(tgt_bbox_[:, :3] * grid_size_tgt)
    bev_tgt = bev_tgt.at[:, 3:6].set(tgt_bbox_[:, 3:6] * grid_size_tgt)
    ious = _bev_iou_ref(out_bbox, bev_tgt)
    cost_class = -out_prob[:, tgt_ids]
    C = w_bbox * cost_bbox + w_class * cost_class + w_giou * (-ious)
    return C.reshape(bs, nq, -1)


if __name__ == "__main__":
    key = jax.random.PRNGKey(0)
    keys = jax.random.split(key, 8)

    bs, nq, nc = 2, 8, 4
    sizes = [3, 5]                      # ground-truth boxes per batch element
    M = sum(sizes)
    w_class, w_bbox, w_giou = 1.0, 2.0, 1.5

    grid_size = jnp.array([16.0, 16.0, 4.0], jnp.float32)
    pc_min = jnp.array([0.0, -8.0, -2.0], jnp.float32)
    pc_size = jnp.array([32.0, 16.0, 4.0], jnp.float32)

    pred_logits = jax.random.normal(keys[0], (bs, nq, nc), jnp.float32)
    p_ctr = jax.random.uniform(keys[1], (bs, nq, 3)) * grid_size
    p_dim = jax.random.uniform(keys[2], (bs, nq, 3), minval=0.5, maxval=3.0)
    p_ang = jax.random.uniform(keys[3], (bs, nq, 1), minval=-np.pi, maxval=np.pi)
    pred_boxes_match = jnp.concatenate([p_ctr, p_dim, p_ang], axis=-1)
    pred_rot = jax.random.normal(keys[4], (bs, nq, 2), jnp.float32)

    t_ctr = pc_min + jax.random.uniform(keys[5], (M, 3)) * pc_size
    t_dim = jax.random.uniform(keys[6], (M, 3), minval=1.0, maxval=5.0)
    t_ang = jax.random.uniform(keys[7], (M, 1), minval=-np.pi, maxval=np.pi)
    gt_boxes = jnp.concatenate([t_ctr, t_dim, t_ang], axis=-1)
    tgt_ids = jnp.array([0, 1, 2, 1, 3, 0, 2, 1], jnp.int32)

    image_size_tgt = jnp.tile(pc_size[None, :], (M, 1))
    offset = jnp.tile(pc_min[None, :], (M, 1))
    grid_size_tgt = jnp.tile(grid_size[None, :], (M, 1))
    grid_size_out_pb = jnp.tile(grid_size[None, :], (bs, 1))

    C = hungarian_matcher_cost(pred_logits, pred_boxes_match, pred_rot,
                               gt_boxes, tgt_ids, image_size_tgt, offset,
                               grid_size_tgt, grid_size_out_pb,
                               cost_class=w_class, cost_bbox=w_bbox,
                               cost_giou=w_giou)
    C = jax.block_until_ready(C)

    C_ref = reference_cost(pred_logits, pred_boxes_match, pred_rot,
                           gt_boxes, tgt_ids, image_size_tgt, offset,
                           grid_size_tgt, grid_size_out_pb,
                           w_class=w_class, w_bbox=w_bbox, w_giou=w_giou)
    # Tolerance accounts for bf16 class-cost matmul + approx-reciprocal (EUP) divides.
    np.testing.assert_allclose(np.asarray(C), np.asarray(C_ref), rtol=5e-3, atol=5e-3)

    # TODO(synk): linear_sum_assignment (Hungarian algorithm) is a sequential
    # host-side algorithm with no Pallas equivalent; kept on host.
    try:
        from scipy.optimize import linear_sum_assignment
        c_np = np.asarray(C)
        col = 0
        indices = []
        for b, sz in enumerate(sizes):
            i, j = linear_sum_assignment(c_np[b, :, col:col + sz])
            indices.append((np.asarray(i, np.int64), np.asarray(j, np.int64)))
            col += sz
    except ImportError:
        indices = None

    print("KERNEL_OK")
</pallas_src>

<mosaic_0001>
module attributes {stable_mosaic.version = 11 : i64} {
  func.func @kernel(%arg0: i32, %arg1: memref<16x128xf32, #tpu.memory_space<vmem>>, %arg2: memref<16x16xf32, #tpu.memory_space<vmem>>, %arg3: memref<16x128xf32, #tpu.memory_space<vmem>>, %arg4: memref<128x128xf32, #tpu.memory_space<vmem>>, %arg5: memref<16x128xf32, #tpu.memory_space<vmem>>) attributes {dimension_semantics = [#tpu.dimension_semantics<parallel>], iteration_bounds = array<i64: 1>, scalar_prefetch = 0 : i64, scratch_operands = 0 : i64, tpu.core_type = #tpu.core_type<tc>, window_params = [{transform_indices = @transform_0, window_bounds = array<i64: 16, 128>}, {transform_indices = @transform_1, window_bounds = array<i64: 16, 16>}, {pipeline_mode = #tpu.pipeline_mode<synchronous>, transform_indices = @transform_2, window_bounds = array<i64: 16, 128>}, {pipeline_mode = #tpu.pipeline_mode<synchronous>, transform_indices = @transform_3, window_bounds = array<i64: 128, 128>}, {transform_indices = @transform_4, window_bounds = array<i64: 16, 128>}]} {
    %c0 = arith.constant 0 : index
    %c0_0 = arith.constant 0 : index
    %0 = vector.load %arg1[%c0, %c0_0] : memref<16x128xf32, #tpu.memory_space<vmem>>, vector<16x128xf32>
    %cst = arith.constant dense<0xFF800000> : vector<16xf32>
    %1 = vector.multi_reduction <maximumf>, %0, %cst [1] : vector<16x128xf32> to vector<16xf32>
    %2 = vector.shape_cast %1 : vector<16xf32> to vector<16x1xf32>
    %3 = vector.broadcast %2 : vector<16x1xf32> to vector<16x128xf32>
    %4 = arith.subf %0, %3 : vector<16x128xf32>
    %5 = math.exp %4 : vector<16x128xf32>
    %cst_1 = arith.constant dense<0.000000e+00> : vector<16xf32>
    %6 = vector.multi_reduction <add>, %5, %cst_1 [1] : vector<16x128xf32> to vector<16xf32>
    %7 = vector.shape_cast %6 : vector<16xf32> to vector<16x1xf32>
    %8 = tpu.reciprocal %7 {approx = true} : vector<16x1xf32> -> vector<16x1xf32>
    %9 = vector.broadcast %8 : vector<16x1xf32> to vector<16x128xf32>
    %10 = arith.mulf %5, %9 : vector<16x128xf32>
    %cst_2 = arith.constant 1.000000e+00 : f32
    %11 = vector.broadcast %cst_2 : f32 to vector<16x128xf32>
    %12 = arith.mulf %10, %11 : vector<16x128xf32>
    %13 = arith.truncf %12 : vector<16x128xf32> to vector<16x128xbf16>
    %c0_3 = arith.constant 0 : index
    %c0_4 = arith.constant 0 : index
    %14 = vector.load %arg4[%c0_3, %c0_4] : memref<128x128xf32, #tpu.memory_space<vmem>>, vector<128x128xf32>
    %15 = arith.truncf %14 : vector<128x128xf32> to vector<128x128xbf16>
    %cst_5 = arith.constant dense<0.000000e+00> : vector<16x128xf32>
    %16 = tpu.matmul %13, %15, %cst_5 {dimension_numbers = #tpu.dot_dimension_numbers<[1], [0], [0], [1], [0, 0, 1, 1], [], []>} : vector<16x128xbf16>, vector<128x128xbf16>, vector<16x128xf32> -> vector<16x128xf32>
    %c0_6 = arith.constant 0 : index
    %c0_7 = arith.constant 0 : index
    %17 = vector.load %arg2[%c0_6, %c0_7] : memref<16x16xf32, #tpu.memory_space<vmem>>, vector<16x16xf32>
    %c0_8 = arith.constant 0 : index
    %c0_9 = arith.constant 0 : index
    %18 = vector.load %arg3[%c0_8, %c0_9] : memref<16x128xf32, #tpu.memory_space<vmem>>, vector<16x128xf32>
    %19 = vector.extract_strided_slice %17 {offsets = [0, 0], sizes = [16, 1], strides = [1, 1]} : vector<16x16xf32> to vector<16x1xf32>
    %20 = vector.extract_strided_slice %18 {offsets = [0, 0], sizes = [1, 128], strides = [1, 1]} : vector<16x128xf32> to vector<1x128xf32>
    %21 = vector.broadcast %19 : vector<16x1xf32> to vector<16x128xf32>
    %22 = vector.broadcast %20 : vector<1x128xf32> to vector<16x128xf32>
    %23 = arith.subf %21, %22 : vector<16x128xf32>
    %24 = math.absf %23 : vector<16x128xf32>
    %25 = arith.addf %16, %24 : vector<16x128xf32>
    %26 = vector.extract_strided_slice %17 {offsets = [0, 1], sizes = [16, 1], strides = [1, 1]} : vector<16x16xf32> to vector<16x1xf32>
    %27 = vector.extract_strided_slice %18 {offsets = [1, 0], sizes = [1, 128], strides = [1, 1]} : vector<16x128xf32> to vector<1x128xf32>
    %28 = vector.broadcast %26 : vector<16x1xf32> to vector<16x128xf32>
    %29 = vector.broadcast %27 : vector<1x128xf32> to vector<16x128xf32>
    %30 = arith.subf %28, %29 : vector<16x128xf32>
    %31 = math.absf %30 : vector<16x128xf32>
    %32 = arith.addf %25, %31 : vector<16x128xf32>
    %33 = vector.extract_strided_slice %17 {offsets = [0, 2], sizes = [16, 1], strides = [1, 1]} : vector<16x16xf32> to vector<16x1xf32>
    %34 = vector.extract_strided_slice %18 {offsets = [2, 0], sizes = [1, 128], strides = [1, 1]} : vector<16x128xf32> to vector<1x128xf32>
    %35 = vector.broadcast %33 : vector<16x1xf32> to vector<16x128xf32>
    %36 = vector.broadcast %34 : vector<1x128xf32> to vector<16x128xf32>
    %37 = arith.subf %35, %36 : vector<16x128xf32>
    %38 = math.absf %37 : vector<16x128xf32>
    %39 = arith.addf %32, %38 : vector<16x128xf32>
    %40 = vector.extract_strided_slice %17 {offsets = [0, 3], sizes = [16, 1], strides = [1, 1]} : vector<16x16xf32> to vector<16x1xf32>
    %41 = vector.extract_strided_slice %18 {offsets = [3, 0], sizes = [1, 128], strides = [1, 1]} : vector<16x128xf32> to vector<1x128xf32>
    %42 = vector.broadcast %40 : vector<16x1xf32> to vector<16x128xf32>
    %43 = vector.broadcast %41 : vector<1x128xf32> to vector<16x128xf32>
    %44 = arith.subf %42, %43 : vector<16x128xf32>
    %45 = math.absf %44 : vector<16x128xf32>
    %46 = arith.addf %39, %45 : vector<16x128xf32>
    %47 = vector.extract_strided_slice %17 {offsets = [0, 4], sizes = [16, 1], strides = [1, 1]} : vector<16x16xf32> to vector<16x1xf32>
    %48 = vector.extract_strided_slice %18 {offsets = [4, 0], sizes = [1, 128], strides = [1, 1]} : vector<16x128xf32> to vector<1x128xf32>
    %49 = vector.broadcast %47 : vector<16x1xf32> to vector<16x128xf32>
    %50 = vector.broadcast %48 : vector<1x128xf32> to vector<16x128xf32>
    %51 = arith.subf %49, %50 : vector<16x128xf32>
    %52 = math.absf %51 : vector<16x128xf32>
    %53 = arith.addf %46, %52 : vector<16x128xf32>
    %54 = vector.extract_strided_slice %17 {offsets = [0, 5], sizes = [16, 1], strides = [1, 1]} : vector<16x16xf32> to vector<16x1xf32>
    %55 = vector.extract_strided_slice %18 {offsets = [5, 0], sizes = [1, 128], strides = [1, 1]} : vector<16x128xf32> to vector<1x128xf32>
    %56 = vector.broadcast %54 : vector<16x1xf32> to vector<16x128xf32>
    %57 = vector.broadcast %55 : vector<1x128xf32> to vector<16x128xf32>
    %58 = arith.subf %56, %57 : vector<16x128xf32>
    %59 = math.absf %58 : vector<16x128xf32>
    %60 = arith.addf %53, %59 : vector<16x128xf32>
    %61 = vector.extract_strided_slice %17 {offsets = [0, 6], sizes = [16, 1], strides = [1, 1]} : vector<16x16xf32> to vector<16x1xf32>
    %62 = vector.extract_strided_slice %18 {offsets = [6, 0], sizes = [1, 128], strides = [1, 1]} : vector<16x128xf32> to vector<1x128xf32>
    %63 = vector.broadcast %61 : vector<16x1xf32> to vector<16x128xf32>
    %64 = vector.broadcast %62 : vector<1x128xf32> to vector<16x128xf32>
    %65 = arith.subf %63, %64 : vector<16x128xf32>
    %66 = math.absf %65 : vector<16x128xf32>
    %67 = arith.addf %60, %66 : vector<16x128xf32>
    %68 = vector.extract_strided_slice %17 {offsets = [0, 7], sizes = [16, 1], strides = [1, 1]} : vector<16x16xf32> to vector<16x1xf32>
    %69 = vector.extract_strided_slice %18 {offsets = [7, 0], sizes = [1, 128], strides = [1, 1]} : vector<16x128xf32> to vector<1x128xf32>
    %70 = vector.broadcast %68 : vector<16x1xf32> to vector<16x128xf32>
    %71 = vector.broadcast %69 : vector<1x128xf32> to vector<16x128xf32>
    %72 = arith.subf %70, %71 : vector<16x128xf32>
    %73 = math.absf %72 : vector<16x128xf32>
    %74 = arith.addf %67, %73 : vector<16x128xf32>
    %75 = vector.extract_strided_slice %17 {offsets = [0, 8], sizes = [16, 1], strides = [1, 1]} : vector<16x16xf32> to vector<16x1xf32>
    %76 = vector.extract_strided_slice %17 {offsets = [0, 9], sizes = [16, 1], strides = [1, 1]} : vector<16x16xf32> to vector<16x1xf32>
    %77 = vector.extract_strided_slice %17 {offsets = [0, 10], sizes = [16, 1], strides = [1, 1]} : vector<16x16xf32> to vector<16x1xf32>
    %78 = vector.extract_strided_slice %17 {offsets = [0, 11], sizes = [16, 1], strides = [1, 1]} : vector<16x16xf32> to vector<16x1xf32>
    %79 = vector.extract_strided_slice %17 {offsets = [0, 12], sizes = [16, 1], strides = [1, 1]} : vector<16x16xf32> to vector<16x1xf32>
    %80 = vector.extract_strided_slice %18 {offsets = [8, 0], sizes = [1, 128], strides = [1, 1]} : vector<16x128xf32> to vector<1x128xf32>
    %81 = vector.extract_strided_slice %18 {offsets = [9, 0], sizes = [1, 128], strides = [1, 1]} : vector<16x128xf32> to vector<1x128xf32>
    %82 = vector.extract_strided_slice %18 {offsets = [10, 0], sizes = [1, 128], strides = [1, 1]} : vector<16x128xf32> to vector<1x128xf32>
    %83 = vector.extract_strided_slice %18 {offsets = [11, 0], sizes = [1, 128], strides = [1, 1]} : vector<16x128xf32> to vector<1x128xf32>
    %84 = vector.extract_strided_slice %18 {offsets = [12, 0], sizes = [1, 128], strides = [1, 1]} : vector<16x128xf32> to vector<1x128xf32>
    %85 = vector.broadcast %77 : vector<16x1xf32> to vector<16x128xf32>
    %86 = vector.broadcast %82 : vector<1x128xf32> to vector<16x128xf32>
    %87 = arith.minimumf %85, %86 : vector<16x128xf32>
    %88 = vector.broadcast %75 : vector<16x1xf32> to vector<16x128xf32>
    %89 = vector.broadcast %80 : vector<1x128xf32> to vector<16x128xf32>
    %90 = arith.maximumf %88, %89 : vector<16x128xf32>
    %91 = arith.subf %87, %90 : vector<16x128xf32>
    %cst_10 = arith.constant 0.000000e+00 : f32
    %92 = vector.broadcast %cst_10 : f32 to vector<16x128xf32>
    %93 = arith.maximumf %91, %92 : vector<16x128xf32>
    %94 = vector.broadcast %78 : vector<16x1xf32> to vector<16x128xf32>
    %95 = vector.broadcast %83 : vector<1x128xf32> to vector<16x128xf32>
    %96 = arith.minimumf %94, %95 : vector<16x128xf32>
    %97 = vector.broadcast %76 : vector<16x1xf32> to vector<16x128xf32>
    %98 = vector.broadcast %81 : vector<1x128xf32> to vector<16x128xf32>
    %99 = arith.maximumf %97, %98 : vector<16x128xf32>
    %100 = arith.subf %96, %99 : vector<16x128xf32>
    %cst_11 = arith.constant 0.000000e+00 : f32
    %101 = vector.broadcast %cst_11 : f32 to vector<16x128xf32>
    %102 = arith.maximumf %100, %101 : vector<16x128xf32>
    %103 = arith.mulf %93, %102 : vector<16x128xf32>
    %104 = vector.broadcast %79 : vector<16x1xf32> to vector<16x128xf32>
    %105 = vector.broadcast %84 : vector<1x128xf32> to vector<16x128xf32>
    %106 = arith.addf %104, %105 : vector<16x128xf32>
    %107 = arith.subf %106, %103 : vector<16x128xf32>
    %cst_12 = arith.constant 9.99999997E-7 : f32
    %108 = vector.broadcast %cst_12 : f32 to vector<16x128xf32>
    %109 = arith.maximumf %107, %108 : vector<16x128xf32>
    %110 = tpu.reciprocal %109 {approx = true} : vector<16x128xf32> -> vector<16x128xf32>
    %cst_13 = arith.constant 1.500000e+00 : f32
    %111 = vector.broadcast %cst_13 : f32 to vector<16x128xf32>
    %112 = arith.mulf %111, %103 : vector<16x128xf32>
    %113 = arith.mulf %112, %110 : vector<16x128xf32>
    %114 = arith.subf %74, %113 : vector<16x128xf32>
    %c0_14 = arith.constant 0 : index
    %c0_15 = arith.constant 0 : index
    %115 = vector.load %arg5[%c0_14, %c0_15] : memref<16x128xf32, #tpu.memory_space<vmem>>, vector<16x128xf32>
    tpu.vector_store %arg5[%c0_14, %c0_15], %114 {strides = array<i32>} : memref<16x128xf32, #tpu.memory_space<vmem>>, vector<16x128xf32>,
    return
  }
  func.func @transform_0(%arg0: i32) -> (i32, i32) {
    %c0_i32 = arith.constant 0 : i32
    %c0_i32_0 = arith.constant 0 : i32
    return %arg0, %c0_i32 : i32, i32
  }
  func.func @transform_1(%arg0: i32) -> (i32, i32) {
    %c0_i32 = arith.constant 0 : i32
    %c0_i32_0 = arith.constant 0 : i32
    return %arg0, %c0_i32 : i32, i32
  }
  func.func @transform_2(%arg0: i32) -> (i32, i32) {
    %c0_i32 = arith.constant 0 : i32
    %c0_i32_0 = arith.constant 0 : i32
    %c0_i32_1 = arith.constant 0 : i32
    return %c0_i32, %c0_i32_0 : i32, i32
  }
  func.func @transform_3(%arg0: i32) -> (i32, i32) {
    %c0_i32 = arith.constant 0 : i32
    %c0_i32_0 = arith.constant 0 : i32
    %c0_i32_1 = arith.constant 0 : i32
    return %c0_i32, %c0_i32_0 : i32, i32
  }
  func.func @transform_4(%arg0: i32) -> (i32, i32) {
    %c0_i32 = arith.constant 0 : i32
    %c0_i32_0 = arith.constant 0 : i32
    return %arg0, %c0_i32 : i32, i32
  }
}

</mosaic_0001>

<llo_original>
// kernel: tpu_custom_call.1
$region0: #{tpu_custom_call.1}
  #allocation0 [shape = 'u32[]', space=smem, size = 0x4, offset = 0x4, fixed_abs, tag = 'smem constant byte address 0x4 - core index']
  #allocation1 [shape = 'u32[144,128]{1,0:T(1,128)}', space=vmem, size = 0x12000, scoped, tag = 'internal scratch']
  %s0 = inlined_call_operand.hbm [shape: f32[16,128], index: 0, kind: input, shape index: {}]
  %s1 = inlined_call_operand.hbm [shape: f32[16,16], index: 1, kind: input, shape index: {}]
  %s2 = inlined_call_operand.hbm [shape: f32[16,128], index: 2, kind: input, shape index: {}]
  %s3 = inlined_call_operand.hbm [shape: f32[128,128], index: 3, kind: input, shape index: {}]
  %s4 = inlined_call_operand.hbm [shape: f32[16,128], index: 4, kind: output, shape index: {}]
  %s5 = sld [smem:[#allocation0]]
  $region42: #{tpu_custom_call.1} parent=0
    _
  %s7 = ssub.s32 1, %s5
  %s8 = scalar_select 0, %s7, %s5
  $region1: #{tpu_custom_call.1} parent=0
    #allocation2 [shape = 'u8[8192]{0}', space=vmem, size = 0x2000, scoped, tag = 'input window, operand 0, single buffered']
    #allocation3 [shape = 's32[1]{0}', space=sflag, size = 0x4, scoped, tag = 'scoped memory for tpu_custom_call.1']
    #allocation4 [shape = 's32[1]{0}', space=sflag, size = 0x4, scoped, tag = 'scoped memory for tpu_custom_call.1']
    #allocation5 [shape = 'u8[8192]{0}', space=vmem, size = 0x2000, scoped, tag = 'input window, operand 1, single buffered']
    #allocation6 [shape = 's32[1]{0}', space=sflag, size = 0x4, scoped, tag = 'scoped memory for tpu_custom_call.1']
    #allocation7 [shape = 'u8[8192]{0}', space=vmem, size = 0x2000, scoped, tag = 'input window, operand 2, single buffered']
    #allocation8 [shape = 'u8[65536]{0}', space=vmem, size = 0x10000, scoped, tag = 'input window, operand 3, single buffered']
    #allocation9 [shape = 's32[1]{0}', space=sflag, size = 0x4, scoped, tag = 'scoped memory for tpu_custom_call.1']
    #allocation10 [shape = 'u8[8192]{0}', space=vmem, size = 0x2000, scoped, tag = 'output window, operand 0, single buffered']
    %9 = vsyncpa [#allocation3], 0
    %10 = vsyncpa [#allocation6], 0
    %11 = vsyncpa [#allocation9], 0
    %12 = vsyncpa [#allocation4], 0
    // Predicated region
    $region2: #{tpu_custom_call.1} parent=1 // pred_check
      _
    $region3: #{tpu_custom_call.1} parent=1 // pred_check_branch
      %14 = sbr.rel (0) target = $region5
    $region4: #{tpu_custom_call.1} parent=1 // pred_region
      %s16 = ssub.s32 256, 256
      %17 = vsyncadd [#allocation3], %s16
      %s18 = sshll.u32 [#allocation2], 4
      %s19 = int_to_ptr.vmem [resolvable:$true] %s18
      %24 = dma.hbm_to_vmem [thread:$0]  %s0, 256, %s19, [#allocation3], 128, 128, 8
    $region5: #{tpu_custom_call.1} parent=1 // pred_fallthru
      _
    // Predicated region
    $region6: #{tpu_custom_call.1} parent=1 // pred_check
      _
    $region7: #{tpu_custom_call.1} parent=1 // pred_check_branch
      %26 = sbr.rel (0) target = $region9
    $region8: #{tpu_custom_call.1} parent=1 // pred_region
      %s28 = ssub.s32 256, 256
      %29 = vsyncadd [#allocation6], %s28
      %s30 = sshll.u32 [#allocation5], 4
      %s31 = int_to_ptr.vmem [resolvable:$true] %s30
      %36 = dma.hbm_to_vmem [thread:$0]  %s1, 256, %s31, [#allocation6], 128, 128, 8
    $region9: #{tpu_custom_call.1} parent=1 // pred_fallthru
      _
    // Predicated region
    $region10: #{tpu_custom_call.1} parent=1 // pred_check
      _
    $region11: #{tpu_custom_call.1} parent=1 // pred_check_branch
      %38 = sbr.rel (0) target = $region13
    $region12: #{tpu_custom_call.1} parent=1 // pred_region
      %s40 = ssub.s32 256, 256
      %41 = vsyncadd [#allocation6], %s40
      %s42 = sshll.u32 [#allocation7], 4
      %s43 = int_to_ptr.vmem [resolvable:$true] %s42
      %48 = dma.hbm_to_vmem [thread:$0]  %s2, 256, %s43, [#allocation6], 128, 128, 8
    $region13: #{tpu_custom_call.1} parent=1 // pred_fallthru
      _
    // Predicated region
    $region14: #{tpu_custom_call.1} parent=1 // pred_check
      _
    $region15: #{tpu_custom_call.1} parent=1 // pred_check_branch
      %50 = sbr.rel (0) target = $region17
    $region16: #{tpu_custom_call.1} parent=1 // pred_region
      %s52 = ssub.s32 2048, 2048
      %53 = vsyncadd [#allocation9], %s52
      %s54 = sshll.u32 [#allocation8], 4
      %s55 = int_to_ptr.vmem [resolvable:$true] %s54
      %60 = dma.hbm_to_vmem [thread:$0]  %s3, 2048, %s55, [#allocation9], 128, 128, 8
    $region17: #{tpu_custom_call.1} parent=1 // pred_fallthru
      _
    // Predicated region
    $region18: #{tpu_custom_call.1} parent=1 // pred_check
      _
    $region19: #{tpu_custom_call.1} parent=1 // pred_check_branch
      %62 = sbr.rel (0) target = $region21
    $region20: #{tpu_custom_call.1} parent=1 // pred_region
      %63 = dma.done [#allocation3], 256
    $region21: #{tpu_custom_call.1} parent=1 // pred_fallthru
      _
    // Predicated region
    $region22: #{tpu_custom_call.1} parent=1 // pred_check
      _
    $region23: #{tpu_custom_call.1} parent=1 // pred_check_branch
      %65 = sbr.rel (0) target = $region25
    $region24: #{tpu_custom_call.1} parent=1 // pred_region
      %66 = dma.done [#allocation6], 256
    $region25: #{tpu_custom_call.1} parent=1 // pred_fallthru
      _
    // Predicated region
    $region26: #{tpu_custom_call.1} parent=1 // pred_check
      _
    $region27: #{tpu_custom_call.1} parent=1 // pred_check_branch
      %68 = sbr.rel (0) target = $region29
    $region28: #{tpu_custom_call.1} parent=1 // pred_region
      %69 = dma.done [#allocation6], 256
    $region29: #{tpu_custom_call.1} parent=1 // pred_fallthru
      _
    // Predicated region
    $region30: #{tpu_custom_call.1} parent=1 // pred_check
      _
    $region31: #{tpu_custom_call.1} parent=1 // pred_check_branch
      %71 = sbr.rel (0) target = $region33
    $region32: #{tpu_custom_call.1} parent=1 // pred_region
      %72 = dma.done [#allocation9], 2048
    $region33: #{tpu_custom_call.1} parent=1 // pred_fallthru
      _
    %v74 = vld [vmem:[#allocation2] sm:$0xff]
    %v75 = vld [vmem:[#allocation2 + $0x8] sm:$0xff]
    %76 = vmax.xlane.f32.xlu0 %v74
    %v77 = vpop.xlane.xlu0 %76
    %78 = vmax.xlane.f32.xlu0 %v75
    %v79 = vpop.xlane.xlu0 %78
    %v80 = vsub.f32 %v74, %v77
    %v81 = vsub.f32 %v75, %v79
    %v82 = vmul.f32 %v80, 1.442695
    %v83 = vpow.pop %v82
    %v84 = vmul.f32 %v81, 1.442695
    %v85 = vpow.pop %v84
    %86 = vadd.xlane.f32.xlu0 %v83
    %v87 = vpop.xlane.xlu0 %86
    %88 = vadd.xlane.f32.xlu0 %v85
    %v89 = vpop.xlane.xlu0 %88
    %v90 = vrcp.pop %v87
    %v91 = vrcp.pop %v89
    %v92 = vmul.f32 %v83, %v90
    %v93 = vmul.f32 %v85, %v91
    %v94 = vpack.c.bf16 %v93, %v92
    %v95 = vld [vmem:[#allocation8] sm:$0xff]
    %v96 = vld [vmem:[#allocation8 + $0x8] sm:$0xff]
    %v97 = vld [vmem:[#allocation8 + $0x10] sm:$0xff]
    %v98 = vld [vmem:[#allocation8 + $0x18] sm:$0xff]
    %v99 = vld [vmem:[#allocation8 + $0x20] sm:$0xff]
    %v100 = vld [vmem:[#allocation8 + $0x28] sm:$0xff]
    %v101 = vld [vmem:[#allocation8 + $0x30] sm:$0xff]
    %v102 = vld [vmem:[#allocation8 + $0x38] sm:$0xff]
    %v103 = vld [vmem:[#allocation8 + $0x40] sm:$0xff]
    %v104 = vld [vmem:[#allocation8 + $0x48] sm:$0xff]
    %v105 = vld [vmem:[#allocation8 + $0x50] sm:$0xff]
    %v106 = vld [vmem:[#allocation8 + $0x58] sm:$0xff]
    %v107 = vld [vmem:[#allocation8 + $0x60] sm:$0xff]
    %v108 = vld [vmem:[#allocation8 + $0x68] sm:$0xff]
    %v109 = vld [vmem:[#allocation8 + $0x70] sm:$0xff]
    %v110 = vld [vmem:[#allocation8 + $0x78] sm:$0xff]
    %v111 = vpack.c.bf16 %v96, %v95
    %v112 = vpack.c.bf16 %v98, %v97
    %v113 = vpack.c.bf16 %v100, %v99
    %v114 = vpack.c.bf16 %v102, %v101
    %v115 = vpack.c.bf16 %v104, %v103
    %v116 = vpack.c.bf16 %v106, %v105
    %v117 = vpack.c.bf16 %v108, %v107
    %v118 = vpack.c.bf16 %v110, %v109
    %v119 = vld [vmem:[#allocation5] sm:$0xff]
    %v120 = vld [vmem:[#allocation5 + $0x8] sm:$0xff]
    %v121 = vld [vmem:[#allocation7] sm:$0xff]
    %v122 = vld [vmem:[#allocation7 + $0x8] sm:$0xff]
    %124 = vset.pattern.permute.xlu0 0
    %125 = vperm.xlu0 %124, %v119
    %v126 = vpop.permute.xlu0 %125
    %129 = vset.pattern.permute.xlu0 0
    %130 = vperm.xlu0 %129, %v120
    %v131 = vpop.permute.xlu0 %130
    %v133 = vlaneseq
    %v134 = vshrl.u32 %v133, 7
    %v135 = vsub.s32 0, %v134
    %v136 = vrot.slane %v121, %v135
    %v137 = vsub.f32 %v126, %v136
    %v138 = vsub.f32 %v131, %v136
    %v139 = vand.u32 2147483647, %v137
    %v140 = vand.u32 2147483647, %v138
    %141 = vmatprep.subr.bf16.mxu0 0
    %142 = vmatpush1.bf16.msra.mxu0 %v111
    %143 = vmatprep.subr.bf16.mxu0 0
    %144 = vmatpush1.bf16.msra.mxu0 %v112
    %145 = vmatprep.subr.bf16.mxu0 0
    %146 = vmatpush1.bf16.msra.mxu0 %v113
    %147 = vmatprep.subr.bf16.mxu0 0
    %148 = vmatpush1.bf16.msra.mxu0 %v114
    %149 = vmatprep.subr.bf16.mxu0 0
    %150 = vmatpush1.bf16.msra.mxu0 %v115
    %151 = vmatprep.subr.bf16.mxu0 0
    %152 = vmatpush1.bf16.msra.mxu0 %v116
    %153 = vmatprep.subr.bf16.mxu0 0
    %154 = vmatpush1.bf16.msra.mxu0 %v117
    %155 = vmatprep.subr.bf16.mxu0 0
    %156 = vmatpush1.bf16.msra.mxu0 %v118
    %157 = vmatprep.subr.bf16.mxu0 0
    %158 = vmatpush1.bf16.msra.mxu0 0
    %159 = vmatprep.subr.bf16.mxu0 0
    %160 = vmatpush1.bf16.msra.mxu0 0
    %161 = vmatprep.subr.bf16.mxu0 0
    %162 = vmatpush1.bf16.msra.mxu0 0
    %163 = vmatprep.subr.bf16.mxu0 0
    %164 = vmatpush1.bf16.msra.mxu0 0
    %165 = vmatprep.subr.bf16.mxu0 0
    %166 = vmatpush1.bf16.msra.mxu0 0
    %167 = vmatprep.subr.bf16.mxu0 0
    %168 = vmatpush1.bf16.msra.mxu0 0
    %169 = vmatprep.subr.bf16.mxu0 0
    %170 = vmatpush1.bf16.msra.mxu0 0
    %171 = vmatprep.subr.bf16.mxu0 0
    %172 = vmatpush1.bf16.msra.mxu0 0
    %173 = vmatprep.mubr.bf16.mxu0 0
    %174 = vmatmul.mubr.bf16.gmra.mrb[0].mxu0 %v94
    %v175 = vpop.f32.mrb[0].mxu0
    %v176 = vadd.f32 %v139, %v175
    %v177 = vpop.f32.mrb[0].mxu0
    %v178 = vpop.f32.mrb[0].mxu0
    %v179 = vadd.f32 %v140, %v178
    %v180 = vpop.f32.mrb[0].mxu0
    %181 = vdwg.mxu0
    %182 = vset.pattern.permute.xlu0 1
    %183 = vperm.xlu0 %182, %v119
    %v184 = vpop.permute.xlu0 %183
    %186 = vset.pattern.permute.xlu0 1
    %187 = vperm.xlu0 %186, %v120
    %v188 = vpop.permute.xlu0 %187
    %v190 = vlaneseq
    %v191 = vshrl.u32 %v190, 7
    %v192 = vsub.s32 1, %v191
    %v193 = vrot.slane %v121, %v192
    %v194 = vsub.f32 %v184, %v193
    %v195 = vsub.f32 %v188, %v193
    %v196 = vand.u32 2147483647, %v194
    %v197 = vand.u32 2147483647, %v195
    %v198 = vadd.f32 %v176, %v196
    %v199 = vadd.f32 %v179, %v197
    %200 = vset.pattern.permute.xlu0 2
    %201 = vperm.xlu0 %200, %v119
    %v202 = vpop.permute.xlu0 %201
    %204 = vset.pattern.permute.xlu0 2
    %205 = vperm.xlu0 %204, %v120
    %v206 = vpop.permute.xlu0 %205
    %v208 = vlaneseq
    %v209 = vshrl.u32 %v208, 7
    %v210 = vsub.s32 2, %v209
    %v211 = vrot.slane %v121, %v210
    %v212 = vsub.f32 %v202, %v211
    %v213 = vsub.f32 %v206, %v211
    %v214 = vand.u32 2147483647, %v212
    %v215 = vand.u32 2147483647, %v213
    %v216 = vadd.f32 %v198, %v214
    %v217 = vadd.f32 %v199, %v215
    %218 = vset.pattern.permute.xlu0 3
    %219 = vperm.xlu0 %218, %v119
    %v220 = vpop.permute.xlu0 %219
    %222 = vset.pattern.permute.xlu0 3
    %223 = vperm.xlu0 %222, %v120
    %v224 = vpop.permute.xlu0 %223
    %v226 = vlaneseq
    %v227 = vshrl.u32 %v226, 7
    %v228 = vsub.s32 3, %v227
    %v229 = vrot.slane %v121, %v228
    %v230 = vsub.f32 %v220, %v229
    %v231 = vsub.f32 %v224, %v229
    %v232 = vand.u32 2147483647, %v230
    %v233 = vand.u32 2147483647, %v231
    %v234 = vadd.f32 %v216, %v232
    %v235 = vadd.f32 %v217, %v233
    %236 = vset.pattern.permute.xlu0 4
    %237 = vperm.xlu0 %236, %v119
    %v238 = vpop.permute.xlu0 %237
    %240 = vset.pattern.permute.xlu0 4
    %241 = vperm.xlu0 %240, %v120
    %v242 = vpop.permute.xlu0 %241
    %v244 = vlaneseq
    %v245 = vshrl.u32 %v244, 7
    %v246 = vsub.s32 4, %v245
    %v247 = vrot.slane %v121, %v246
    %v248 = vsub.f32 %v238, %v247
    %v249 = vsub.f32 %v242, %v247
    %v250 = vand.u32 2147483647, %v248
    %v251 = vand.u32 2147483647, %v249
    %v252 = vadd.f32 %v234, %v250
    %v253 = vadd.f32 %v235, %v251
    %254 = vset.pattern.permute.xlu0 5
    %255 = vperm.xlu0 %254, %v119
    %v256 = vpop.permute.xlu0 %255
    %258 = vset.pattern.permute.xlu0 5
    %259 = vperm.xlu0 %258, %v120
    %v260 = vpop.permute.xlu0 %259
    %v262 = vlaneseq
    %v263 = vshrl.u32 %v262, 7
    %v264 = vsub.s32 5, %v263
    %v265 = vrot.slane %v121, %v264
    %v266 = vsub.f32 %v256, %v265
    %v267 = vsub.f32 %v260, %v265
    %v268 = vand.u32 2147483647, %v266
    %v269 = vand.u32 2147483647, %v267
    %v270 = vadd.f32 %v252, %v268
    %v271 = vadd.f32 %v253, %v269
    %272 = vset.pattern.permute.xlu0 6
    %273 = vperm.xlu0 %272, %v119
    %v274 = vpop.permute.xlu0 %273
    %276 = vset.pattern.permute.xlu0 6
    %277 = vperm.xlu0 %276, %v120
    %v278 = vpop.permute.xlu0 %277
    %v280 = vlaneseq
    %v281 = vshrl.u32 %v280, 7
    %v282 = vsub.s32 6, %v281
    %v283 = vrot.slane %v121, %v282
    %v284 = vsub.f32 %v274, %v283
    %v285 = vsub.f32 %v278, %v283
    %v286 = vand.u32 2147483647, %v284
    %v287 = vand.u32 2147483647, %v285
    %v288 = vadd.f32 %v270, %v286
    %v289 = vadd.f32 %v271, %v287
    %290 = vset.pattern.permute.xlu0 7
    %291 = vperm.xlu0 %290, %v119
    %v292 = vpop.permute.xlu0 %291
    %294 = vset.pattern.permute.xlu0 7
    %295 = vperm.xlu0 %294, %v120
    %v296 = vpop.permute.xlu0 %295
    %v298 = vlaneseq
    %v299 = vshrl.u32 %v298, 7
    %v300 = vsub.s32 7, %v299
    %v301 = vrot.slane %v121, %v300
    %v302 = vsub.f32 %v292, %v301
    %v303 = vsub.f32 %v296, %v301
    %v304 = vand.u32 2147483647, %v302
    %v305 = vand.u32 2147483647, %v303
    %v306 = vadd.f32 %v288, %v304
    %v307 = vadd.f32 %v289, %v305
    %308 = vset.pattern.permute.xlu0 10
    %309 = vperm.xlu0 %308, %v119
    %v310 = vpop.permute.xlu0 %309
    %312 = vset.pattern.permute.xlu0 10
    %313 = vperm.xlu0 %312, %v120
    %v314 = vpop.permute.xlu0 %313
    %v316 = vlaneseq
    %v317 = vshrl.u32 %v316, 7
    %v318 = vsub.s32 2, %v317
    %v319 = vrot.slane %v122, %v318
    %v320 = vmin.f32 %v310, %v319
    %v321 = vmin.f32 %v314, %v319
    %322 = vset.pattern.permute.xlu0 8
    %323 = vperm.xlu0 %322, %v119
    %v324 = vpop.permute.xlu0 %323
    %326 = vset.pattern.permute.xlu0 8
    %327 = vperm.xlu0 %326, %v120
    %v328 = vpop.permute.xlu0 %327
    %v330 = vlaneseq
    %v331 = vshrl.u32 %v330, 7
    %v332 = vsub.s32 0, %v331
    %v333 = vrot.slane %v122, %v332
    %v334 = vmax.f32 %v324, %v333
    %v335 = vmax.f32 %v328, %v333
    %v336 = vsub.f32 %v320, %v334
    %v337 = vsub.f32 %v321, %v335
    %v338 = vmax.f32 %v336, 0.0
    %v339 = vmax.f32 %v337, 0.0
    %340 = vset.pattern.permute.xlu0 11
    %341 = vperm.xlu0 %340, %v119
    %v342 = vpop.permute.xlu0 %341
    %344 = vset.pattern.permute.xlu0 11
    %345 = vperm.xlu0 %344, %v120
    %v346 = vpop.permute.xlu0 %345
    %v348 = vlaneseq
    %v349 = vshrl.u32 %v348, 7
    %v350 = vsub.s32 3, %v349
    %v351 = vrot.slane %v122, %v350
    %v352 = vmin.f32 %v342, %v351
    %v353 = vmin.f32 %v346, %v351
    %354 = vset.pattern.permute.xlu0 9
    %355 = vperm.xlu0 %354, %v119
    %v356 = vpop.permute.xlu0 %355
    %358 = vset.pattern.permute.xlu0 9
    %359 = vperm.xlu0 %358, %v120
    %v360 = vpop.permute.xlu0 %359
    %v362 = vlaneseq
    %v363 = vshrl.u32 %v362, 7
    %v364 = vsub.s32 1, %v363
    %v365 = vrot.slane %v122, %v364
    %v366 = vmax.f32 %v356, %v365
    %v367 = vmax.f32 %v360, %v365
    %v368 = vsub.f32 %v352, %v366
    %v369 = vsub.f32 %v353, %v367
    %v370 = vmax.f32 %v368, 0.0
    %v371 = vmax.f32 %v369, 0.0
    %v372 = vmul.f32 %v338, %v370
    %v373 = vmul.f32 %v339, %v371
    %374 = vset.pattern.permute.xlu0 12
    %375 = vperm.xlu0 %374, %v119
    %v376 = vpop.permute.xlu0 %375
    %378 = vset.pattern.permute.xlu0 12
    %379 = vperm.xlu0 %378, %v120
    %v380 = vpop.permute.xlu0 %379
    %v382 = vlaneseq
    %v383 = vshrl.u32 %v382, 7
    %v384 = vsub.s32 4, %v383
    %v385 = vrot.slane %v122, %v384
    %v386 = vadd.f32 %v376, %v385
    %v387 = vadd.f32 %v380, %v385
    %v388 = vsub.f32 %v386, %v372
    %v389 = vsub.f32 %v387, %v373
    %v390 = vmax.f32 %v388, 1e-06
    %v391 = vmax.f32 %v389, 1e-06
    %v392 = vrcp.pop %v390
    %v393 = vrcp.pop %v391
    %v394 = vmul.f32 %v372, 1.5
    %v395 = vmul.f32 %v373, 1.5
    %v396 = vmul.f32 %v394, %v392
    %v397 = vmul.f32 %v395, %v393
    %v398 = vsub.f32 %v306, %v396
    %v399 = vsub.f32 %v307, %v397
    %400 = vst [vmem:[#allocation10] sm:$0xff] %v398
    %401 = vst [vmem:[#allocation10 + $0x8] sm:$0xff] %v399
    // Predicated region
    $region34: #{tpu_custom_call.1} parent=1 // pred_check
      _
    $region35: #{tpu_custom_call.1} parent=1 // pred_check_branch
      %403 = sbr.rel (0) target = $region37
    $region36: #{tpu_custom_call.1} parent=1 // pred_region
      %s405 = ssub.s32 256, 256
      %406 = vsyncadd [#allocation4], %s405
      %s407 = sshll.u32 [#allocation10], 4
      %s408 = int_to_ptr.vmem [resolvable:$true] %s407
      %413 = dma.vmem_to_hbm [thread:$0]  %s408, 256, %s4, [#allocation4], 128, 128, 8
    $region37: #{tpu_custom_call.1} parent=1 // pred_fallthru
      _
    // Predicated region
    $region38: #{tpu_custom_call.1} parent=1 // pred_check
      _
    $region39: #{tpu_custom_call.1} parent=1 // pred_check_branch
      %415 = sbr.rel (0) target = $region41
    $region40: #{tpu_custom_call.1} parent=1 // pred_region
      %416 = dma.done [#allocation4], 256
    $region41: #{tpu_custom_call.1} parent=1 // pred_fallthru
      _
    %417 = vsyncpa [#allocation3], 1
    %418 = vsyncpa [#allocation6], 1
    %419 = vsyncpa [#allocation9], 1
    %420 = vsyncpa [#allocation4], 1

</llo_original>
